<compile_context>
chip_gen: v6e
topology: v6e:2x2x1
jax: 0.10.0
libtpu: 0.0.40
codegen_flags: <defaults>
</compile_context>

<pallas_src>
import jax
import jax.numpy as jnp
from jax import lax
from jax.experimental import pallas as pl
from jax.experimental.pallas import tpu as pltpu


def _cdiv(a, b):
    return -(-a // b)


def _round_up(a, b):
    return _cdiv(a, b) * b


# ----------------------------------------------------------------------------
# Kernels
# ----------------------------------------------------------------------------
def _l2norm_rowwise_kernel(x_ref, o_ref):
    """Direct per-row reduction. Used when D >= 128 or D does not divide 128."""
    x = x_ref[...].astype(jnp.float32)
    sumsq = jnp.sum(x * x, axis=-1, keepdims=True)            # (tm, 1) -> XLU
    o_ref[...] = (x * lax.rsqrt(sumsq)).astype(o_ref.dtype)   # rsqrt -> EUP slot


def _l2norm_packed_kernel(x_ref, m_ref, o_ref):
    """k logical rows of width D packed per 128-lane row (W = k*D = 128).

    m_ref is a (W, W) block-diagonal ones matrix: (sq @ m)[r, l] is the sum of
    squares of the D-lane group containing lane l, broadcast across that
    group.  Keeps both the reduction and the store fully lane-dense; the MXU
    is idle otherwise so the matmul is free on this DMA-bound kernel.
    """
    x = x_ref[...].astype(jnp.float32)
    sq = x * x
    sumsq = jnp.dot(
        sq,
        m_ref[...],
        preferred_element_type=jnp.float32,
        precision=lax.Precision.HIGHEST,   # keep f32 accuracy for the reduction
    )
    o_ref[...] = (x * lax.rsqrt(sumsq)).astype(o_ref.dtype)


# ----------------------------------------------------------------------------
# Wrapper
# ----------------------------------------------------------------------------
_SMALL_BYTES = 1 << 16          # below this, fused XLA beats a pallas_call launch
_TARGET_BLOCK_BYTES = 4 << 20   # ~4 MiB blocks: near HBM roofline, v7x-safe
_VMEM_CAP_BYTES = 48 << 20      # below v7x's 64 MiB physical VMEM


def l2_normalize(x, training: bool = False, *, force_pallas: bool = False):
    """JAX/Pallas equivalent of Normalize.forward."""
    if training:
        return x

    if x.ndim != 2:
        # PyTorch's .view(-1, 1) only broadcasts cleanly for 2-D input; for
        # higher rank we normalize along the last dim of the flattened view.
        lead = x.shape[:-1]
        flat = l2_normalize(
            x.reshape(-1, x.shape[-1]), training=False, force_pallas=force_pallas
        )
        return flat.reshape(*lead, x.shape[-1])

    N, D = x.shape
    itemsize = x.dtype.itemsize

    # Tiny inputs: plain JAX (pallas launch overhead dominates).
    if (N * D * itemsize < _SMALL_BYTES) and not force_pallas:
        xf = x.astype(jnp.float32)
        inv = lax.rsqrt(jnp.sum(xf * xf, axis=-1, keepdims=True))
        return (xf * inv).astype(x.dtype)

    # ---- tiling parameters ---------------------------------------------------
    # Pack k rows per 128-lane output row when D is a small divisor of 128 so
    # the stores are unmasked (lane-dense out_spec).
    pack = 128 // D if (D < 128 and 128 % D == 0) else 1
    W = pack * D

    sub_pack = max(1, 4 // itemsize)   # sublane row packing (f32 -> 1, bf16 -> 2)
    min_tile = 8 * sub_pack            # minimum second-minor block size

    # Pad only up to a multiple of `pack` (required for the bitcast reshape
    # (N, D) -> (rows, W)).  Partial grid blocks are handled by Pallas' own
    # block clipping -- rows are independent, so padded-region garbage only
    # lands in output rows that are sliced off.  No input copy in the common
    # case (N % pack == 0).
    n_pack = _round_up(N, pack) if pack > 1 else N
    if n_pack != N:
        # Pads with ones so every computed row stays finite.  This is the only
        # branch that copies the input.
        pad = jnp.ones((n_pack - N, D), x.dtype)
        x_p = jnp.concatenate([x, pad], axis=0)
    else:
        x_p = x
    rows = n_pack // pack
    x_p = x_p.reshape(rows, W)

    row_tile = (_TARGET_BLOCK_BYTES // max(1, W * itemsize)) // min_tile * min_tile
    row_tile = max(min_tile, row_tile)
    row_tile = min(row_tile, _round_up(rows, min_tile))
    grid = (_cdiv(rows, row_tile),)

    # ---- VMEM budget: in + out double-buffered, f32 temps, mask, headroom ----
    block_bytes = row_tile * W * itemsize
    vmem_limit = int(block_bytes * 4 * 1.5) + row_tile * W * 4 * 3 + W * W * 4 + (2 << 20)
    vmem_limit = int(min(max(vmem_limit, 16 << 20), _VMEM_CAP_BYTES))

    compiler_params = pltpu.CompilerParams(
        dimension_semantics=("parallel",),   # megacore parts may split the grid
        vmem_limit_bytes=vmem_limit,
    )
    out_shape = jax.ShapeDtypeStruct((rows, W), x.dtype)
    x_spec = pl.BlockSpec((row_tile, W), lambda i: (i, 0))

    if pack > 1:
        ids = jnp.arange(W) // D
        mask = (ids[:, None] == ids[None, :]).astype(jnp.float32)  # block-diag ones
        out = pl.pallas_call(
            _l2norm_packed_kernel,
            out_shape=out_shape,
            grid_spec=pl.GridSpec(
                grid=grid,
                in_specs=[x_spec, pl.BlockSpec((W, W), lambda i: (0, 0))],
                out_specs=x_spec,
            ),
            compiler_params=compiler_params,
        )(x_p, mask)
    else:
        out = pl.pallas_call(
            _l2norm_rowwise_kernel,
            out_shape=out_shape,
            grid_spec=pl.GridSpec(grid=grid, in_specs=[x_spec], out_specs=x_spec),
            compiler_params=compiler_params,
        )(x_p)

    out = out.reshape(n_pack, D)
    return out if n_pack == N else out[:N]


# ----------------------------------------------------------------------------
# Test
# ----------------------------------------------------------------------------
if __name__ == "__main__":
    key = jax.random.PRNGKey(0)
    k1, k2, k3, k4, k5 = jax.random.split(key, 5)

    def ref(x):
        n = jnp.linalg.norm(x.astype(jnp.float32), ord=2, axis=-1, keepdims=True)
        return (x.astype(jnp.float32) / n).astype(x.dtype)

    # 1) tiny shape consistent with the module (hidden=32): small-input fast path
    x_small = jax.random.normal(k1, (16, 32), dtype=jnp.float32)
    out_small = jax.block_until_ready(l2_normalize(x_small, training=False))
    assert jnp.allclose(out_small, ref(x_small), atol=1e-5, rtol=1e-5), "small mismatch"

    # training mode is the identity
    out_train = jax.block_until_ready(l2_normalize(x_small, training=True))
    assert jnp.array_equal(out_train, x_small), "training-mode mismatch"

    # 2) Pallas packed path: D=32 < 128 -> 4 rows packed per lane-dense 128-wide
    #    row; N=300 divisible by pack -> zero-copy path, partial grid block.
    x_packed = jax.random.normal(k2, (300, 32), dtype=jnp.float32)
    out_packed = jax.block_until_ready(l2_normalize(x_packed, force_pallas=True))
    assert jnp.allclose(out_packed, ref(x_packed), atol=1e-5, rtol=1e-5), "packed mismatch"

    # 3) Pallas packed path with N % pack != 0 -> exercises the pad + slice branch
    x_unal = jax.random.normal(k3, (301, 32), dtype=jnp.float32)
    out_unal = jax.block_until_ready(l2_normalize(x_unal, force_pallas=True))
    assert jnp.allclose(out_unal, ref(x_unal), atol=1e-5, rtol=1e-5), "unaligned mismatch"

    # 4) Pallas row-wise path: D multiple of 128 -> direct lane-dense reduction
    x_wide = jax.random.normal(k4, (96, 256), dtype=jnp.float32)
    out_wide = jax.block_until_ready(l2_normalize(x_wide, force_pallas=True))
    assert jnp.allclose(out_wide, ref(x_wide), atol=1e-5, rtol=1e-5), "rowwise mismatch"

    # 5) bf16 row-wise path (16-row sublane packing minimum)
    x_bf16 = jax.random.normal(k5, (128, 384), dtype=jnp.bfloat16)
    out_bf16 = jax.block_until_ready(l2_normalize(x_bf16, force_pallas=True))
    assert jnp.allclose(out_bf16.astype(jnp.float32), ref(x_bf16).astype(jnp.float32),
                        atol=2e-2, rtol=2e-2), "bf16 mismatch"

    print("KERNEL_OK")
</pallas_src>

<mosaic_0001>
module attributes {stable_mosaic.version = 11 : i64} {
  func.func @_l2norm_packed_kernel(%arg0: i32, %arg1: memref<80x128xf32, #tpu.memory_space<vmem>>, %arg2: memref<128x128xf32, #tpu.memory_space<vmem>>, %arg3: memref<80x128xf32, #tpu.memory_space<vmem>>) attributes {dimension_semantics = [#tpu.dimension_semantics<parallel>], iteration_bounds = array<i64: 1>, scalar_prefetch = 0 : i64, scratch_operands = 0 : i64, tpu.core_type = #tpu.core_type<tc>, window_params = [{transform_indices = @transform_0, window_bounds = array<i64: 80, 128>}, {pipeline_mode = #tpu.pipeline_mode<synchronous>, transform_indices = @transform_1, window_bounds = array<i64: 128, 128>}, {transform_indices = @transform_2, window_bounds = array<i64: 80, 128>}]} {
    %c0 = arith.constant 0 : index
    %c0_0 = arith.constant 0 : index
    %0 = vector.load %arg1[%c0, %c0_0] : memref<80x128xf32, #tpu.memory_space<vmem>>, vector<80x128xf32>
    %1 = arith.mulf %0, %0 : vector<80x128xf32>
    %c0_1 = arith.constant 0 : index
    %c0_2 = arith.constant 0 : index
    %2 = vector.load %arg2[%c0_1, %c0_2] : memref<128x128xf32, #tpu.memory_space<vmem>>, vector<128x128xf32>
    %cst = arith.constant dense<0.000000e+00> : vector<80x128xf32>
    %3 = tpu.matmul %1, %2, %cst {dimension_numbers = #tpu.dot_dimension_numbers<[1], [0], [0], [1], [0, 0, 1, 1], [], []>, precision = #tpu.contract_precision<fp32>} : vector<80x128xf32>, vector<128x128xf32>, vector<80x128xf32> -> vector<80x128xf32>
    %4 = math.rsqrt %3 : vector<80x128xf32>
    %5 = arith.mulf %0, %4 : vector<80x128xf32>
    %c0_3 = arith.constant 0 : index
    %c0_4 = arith.constant 0 : index
    %6 = vector.load %arg3[%c0_3, %c0_4] : memref<80x128xf32, #tpu.memory_space<vmem>>, vector<80x128xf32>
    tpu.vector_store %arg3[%c0_3, %c0_4], %5 {strides = array<i32>} : memref<80x128xf32, #tpu.memory_space<vmem>>, vector<80x128xf32>,
    return
  }
  func.func @transform_0(%arg0: i32) -> (i32, i32) {
    %c0_i32 = arith.constant 0 : i32
    %c0_i32_0 = arith.constant 0 : i32
    return %arg0, %c0_i32 : i32, i32
  }
  func.func @transform_1(%arg0: i32) -> (i32, i32) {
    %c0_i32 = arith.constant 0 : i32
    %c0_i32_0 = arith.constant 0 : i32
    %c0_i32_1 = arith.constant 0 : i32
    return %c0_i32, %c0_i32_0 : i32, i32
  }
  func.func @transform_2(%arg0: i32) -> (i32, i32) {
    %c0_i32 = arith.constant 0 : i32
    %c0_i32_0 = arith.constant 0 : i32
    return %arg0, %c0_i32 : i32, i32
  }
}

</mosaic_0001>

<llo_original>
// kernel: tpu_custom_call.1
$region0: #{tpu_custom_call.1}
  #allocation0 [shape = 'u32[]', space=smem, size = 0x4, offset = 0x4, fixed_abs, tag = 'smem constant byte address 0x4 - core index']
  #allocation1 [shape = 'u32[144,128]{1,0:T(1,128)}', space=vmem, size = 0x12000, scoped, tag = 'internal scratch']
  %s0 = inlined_call_operand.hbm [shape: f32[75,128], index: 0, kind: input, shape index: {}]
  %s1 = inlined_call_operand.hbm [shape: f32[128,128], index: 1, kind: input, shape index: {}]
  %s2 = inlined_call_operand.hbm [shape: f32[75,128], index: 2, kind: output, shape index: {}]
  %s3 = sld [smem:[#allocation0]]
  $region26: #{tpu_custom_call.1} parent=0
    _
  %s5 = ssub.s32 1, %s3
  %s6 = scalar_select 0, %s5, %s3
  $region1: #{tpu_custom_call.1} parent=0
    #allocation2 [shape = 'u8[40960]{0}', space=vmem, size = 0xa000, scoped, tag = 'input window, operand 0, single buffered']
    #allocation3 [shape = 's32[1]{0}', space=sflag, size = 0x4, scoped, tag = 'scoped memory for tpu_custom_call.1']
    #allocation4 [shape = 's32[1]{0}', space=sflag, size = 0x4, scoped, tag = 'scoped memory for tpu_custom_call.1']
    #allocation5 [shape = 'u8[65536]{0}', space=vmem, size = 0x10000, scoped, tag = 'input window, operand 1, single buffered']
    #allocation6 [shape = 's32[1]{0}', space=sflag, size = 0x4, scoped, tag = 'scoped memory for tpu_custom_call.1']
    #allocation7 [shape = 'u8[40960]{0}', space=vmem, size = 0xa000, scoped, tag = 'output window, operand 0, single buffered']
    %7 = vsyncpa [#allocation3], 0
    %8 = vsyncpa [#allocation6], 0
    %9 = vsyncpa [#allocation4], 0
    // Predicated region
    $region2: #{tpu_custom_call.1} parent=1 // pred_check
      _
    $region3: #{tpu_custom_call.1} parent=1 // pred_check_branch
      %11 = sbr.rel (0) target = $region5
    $region4: #{tpu_custom_call.1} parent=1 // pred_region
      %s13 = ssub.s32 1280, 1280
      %14 = vsyncadd [#allocation3], %s13
      %s15 = sshll.u32 [#allocation2], 4
      %s16 = int_to_ptr.vmem [resolvable:$true] %s15
      %21 = dma.hbm_to_vmem [thread:$0]  %s0, 1280, %s16, [#allocation3], 128, 128, 8
    $region5: #{tpu_custom_call.1} parent=1 // pred_fallthru
      _
    // Predicated region
    $region6: #{tpu_custom_call.1} parent=1 // pred_check
      _
    $region7: #{tpu_custom_call.1} parent=1 // pred_check_branch
      %23 = sbr.rel (0) target = $region9
    $region8: #{tpu_custom_call.1} parent=1 // pred_region
      %s25 = ssub.s32 2048, 2048
      %26 = vsyncadd [#allocation6], %s25
      %s27 = sshll.u32 [#allocation5], 4
      %s28 = int_to_ptr.vmem [resolvable:$true] %s27
      %33 = dma.hbm_to_vmem [thread:$0]  %s1, 2048, %s28, [#allocation6], 128, 128, 8
    $region9: #{tpu_custom_call.1} parent=1 // pred_fallthru
      _
    // Predicated region
    $region10: #{tpu_custom_call.1} parent=1 // pred_check
      _
    $region11: #{tpu_custom_call.1} parent=1 // pred_check_branch
      %35 = sbr.rel (0) target = $region13
    $region12: #{tpu_custom_call.1} parent=1 // pred_region
      %36 = dma.done [#allocation3], 1280
    $region13: #{tpu_custom_call.1} parent=1 // pred_fallthru
      _
    // Predicated region
    $region14: #{tpu_custom_call.1} parent=1 // pred_check
      _
    $region15: #{tpu_custom_call.1} parent=1 // pred_check_branch
      %38 = sbr.rel (0) target = $region17
    $region16: #{tpu_custom_call.1} parent=1 // pred_region
      %39 = dma.done [#allocation6], 2048
    $region17: #{tpu_custom_call.1} parent=1 // pred_fallthru
      _
    %v40 = vld [vmem:[#allocation2] sm:$0xff]
    %v41 = vld [vmem:[#allocation2 + $0x8] sm:$0xff]
    %v42 = vld [vmem:[#allocation2 + $0x10] sm:$0xff]
    %v43 = vld [vmem:[#allocation2 + $0x18] sm:$0xff]
    %v44 = vld [vmem:[#allocation2 + $0x20] sm:$0xff]
    %v45 = vld [vmem:[#allocation2 + $0x28] sm:$0xff]
    %v46 = vld [vmem:[#allocation2 + $0x30] sm:$0xff]
    %v47 = vld [vmem:[#allocation2 + $0x38] sm:$0xff]
    %v48 = vld [vmem:[#allocation2 + $0x40] sm:$0xff]
    %v49 = vld [vmem:[#allocation2 + $0x48] sm:$0xff]
    %v50 = vmul.f32 %v40, %v40
    %v51 = vmul.f32 %v41, %v41
    %v52 = vmul.f32 %v42, %v42
    %v53 = vmul.f32 %v43, %v43
    %v54 = vmul.f32 %v44, %v44
    %v55 = vmul.f32 %v45, %v45
    %v56 = vmul.f32 %v46, %v46
    %v57 = vmul.f32 %v47, %v47
    %v58 = vmul.f32 %v48, %v48
    %v59 = vmul.f32 %v49, %v49
    %v60 = vld [vmem:[#allocation5] sm:$0xff]
    %v61 = vld [vmem:[#allocation5 + $0x8] sm:$0xff]
    %v62 = vld [vmem:[#allocation5 + $0x10] sm:$0xff]
    %v63 = vld [vmem:[#allocation5 + $0x18] sm:$0xff]
    %v64 = vld [vmem:[#allocation5 + $0x20] sm:$0xff]
    %v65 = vld [vmem:[#allocation5 + $0x28] sm:$0xff]
    %v66 = vld [vmem:[#allocation5 + $0x30] sm:$0xff]
    %v67 = vld [vmem:[#allocation5 + $0x38] sm:$0xff]
    %v68 = vld [vmem:[#allocation5 + $0x40] sm:$0xff]
    %v69 = vld [vmem:[#allocation5 + $0x48] sm:$0xff]
    %v70 = vld [vmem:[#allocation5 + $0x50] sm:$0xff]
    %v71 = vld [vmem:[#allocation5 + $0x58] sm:$0xff]
    %v72 = vld [vmem:[#allocation5 + $0x60] sm:$0xff]
    %v73 = vld [vmem:[#allocation5 + $0x68] sm:$0xff]
    %v74 = vld [vmem:[#allocation5 + $0x70] sm:$0xff]
    %v75 = vld [vmem:[#allocation5 + $0x78] sm:$0xff]
    %76 = vmatprep.subr.mxu0 0.0
    %v77 = vand.u32 %v75, 4294901760
    %78 = vmatpush1.msra.mxu0 %v77
    %79 = vmatprep.subr.mxu0 0.0
    %v80 = vand.u32 %v74, 4294901760
    %81 = vmatpush1.msra.mxu0 %v80
    %82 = vmatprep.subr.mxu0 0.0
    %v83 = vand.u32 %v73, 4294901760
    %84 = vmatpush1.msra.mxu0 %v83
    %85 = vmatprep.subr.mxu0 0.0
    %v86 = vand.u32 %v72, 4294901760
    %87 = vmatpush1.msra.mxu0 %v86
    %88 = vmatprep.subr.mxu0 0.0
    %v89 = vand.u32 %v71, 4294901760
    %90 = vmatpush1.msra.mxu0 %v89
    %91 = vmatprep.subr.mxu0 0.0
    %v92 = vand.u32 %v70, 4294901760
    %93 = vmatpush1.msra.mxu0 %v92
    %94 = vmatprep.subr.mxu0 0.0
    %v95 = vand.u32 %v69, 4294901760
    %96 = vmatpush1.msra.mxu0 %v95
    %97 = vmatprep.subr.mxu0 0.0
    %v98 = vand.u32 %v68, 4294901760
    %99 = vmatpush1.msra.mxu0 %v98
    %100 = vmatprep.subr.mxu0 0.0
    %v101 = vand.u32 %v67, 4294901760
    %102 = vmatpush1.msra.mxu0 %v101
    %103 = vmatprep.subr.mxu0 0.0
    %v104 = vand.u32 %v66, 4294901760
    %105 = vmatpush1.msra.mxu0 %v104
    %106 = vmatprep.subr.mxu0 0.0
    %v107 = vand.u32 %v65, 4294901760
    %108 = vmatpush1.msra.mxu0 %v107
    %109 = vmatprep.subr.mxu0 0.0
    %v110 = vand.u32 %v64, 4294901760
    %111 = vmatpush1.msra.mxu0 %v110
    %112 = vmatprep.subr.mxu0 0.0
    %v113 = vand.u32 %v63, 4294901760
    %114 = vmatpush1.msra.mxu0 %v113
    %115 = vmatprep.subr.mxu0 0.0
    %v116 = vand.u32 %v62, 4294901760
    %117 = vmatpush1.msra.mxu0 %v116
    %118 = vmatprep.subr.mxu0 0.0
    %v119 = vand.u32 %v61, 4294901760
    %120 = vmatpush1.msra.mxu0 %v119
    %121 = vmatprep.subr.mxu0 0.0
    %v122 = vand.u32 %v60, 4294901760
    %123 = vmatpush1.msra.mxu0 %v122
    %124 = vmatprep.subr.mxu0 0.0
    %125 = vmatpush2.msra.mxu0 0.0
    %126 = vmatprep.subr.mxu0 0.0
    %127 = vmatpush2.msra.mxu0 0.0
    %128 = vmatprep.subr.mxu0 0.0
    %129 = vmatpush2.msra.mxu0 0.0
    %130 = vmatprep.subr.mxu0 0.0
    %131 = vmatpush2.msra.mxu0 0.0
    %132 = vmatprep.subr.mxu0 0.0
    %133 = vmatpush2.msra.mxu0 0.0
    %134 = vmatprep.subr.mxu0 0.0
    %135 = vmatpush2.msra.mxu0 0.0
    %136 = vmatprep.subr.mxu0 0.0
    %137 = vmatpush2.msra.mxu0 0.0
    %138 = vmatprep.subr.mxu0 0.0
    %139 = vmatpush2.msra.mxu0 0.0
    %140 = vmatprep.subr.mxu0 0.0
    %141 = vmatpush2.msra.mxu0 0.0
    %142 = vmatprep.subr.mxu0 0.0
    %143 = vmatpush2.msra.mxu0 0.0
    %144 = vmatprep.subr.mxu0 0.0
    %145 = vmatpush2.msra.mxu0 0.0
    %146 = vmatprep.subr.mxu0 0.0
    %147 = vmatpush2.msra.mxu0 0.0
    %148 = vmatprep.subr.mxu0 0.0
    %149 = vmatpush2.msra.mxu0 0.0
    %150 = vmatprep.subr.mxu0 0.0
    %151 = vmatpush2.msra.mxu0 0.0
    %152 = vmatprep.subr.mxu0 0.0
    %153 = vmatpush2.msra.mxu0 0.0
    %154 = vmatprep.subr.mxu0 0.0
    %155 = vmatpush2.msra.mxu0 0.0
    %156 = vmatprep.mubr.f32.mxu0 0.0
    %v157 = vand.u32 %v50, 4294901760
    %v158 = vsub.f32 %v50, %v157
    %v159 = vand.u32 %v158, 4294901760
    %v160 = vsub.f32 %v158, %v159
    %v161 = vand.u32 %v160, 4294901760
    %162 = vmatmul.mubr.f32.gmra.mxu0 %v161
    %v163 = vpop.f32.mrf.mxu0
    %v164 = vadd.f32 0.0, %v163
    %v165 = vpop.f32.mrf.mxu0
    %166 = vmatprep.mubr.f32.mxu0 0.0
    %v167 = vand.u32 %v51, 4294901760
    %v168 = vsub.f32 %v51, %v167
    %v169 = vand.u32 %v168, 4294901760
    %v170 = vsub.f32 %v168, %v169
    %v171 = vand.u32 %v170, 4294901760
    %172 = vmatmul.mubr.f32.gmra.mxu0 %v171
    %v173 = vpop.f32.mrf.mxu0
    %v174 = vadd.f32 0.0, %v173
    %v175 = vpop.f32.mrf.mxu0
    %176 = vmatprep.mubr.f32.mxu0 0.0
    %v177 = vand.u32 %v52, 4294901760
    %v178 = vsub.f32 %v52, %v177
    %v179 = vand.u32 %v178, 4294901760
    %v180 = vsub.f32 %v178, %v179
    %v181 = vand.u32 %v180, 4294901760
    %182 = vmatmul.mubr.f32.gmra.mxu0 %v181
    %v183 = vpop.f32.mrf.mxu0
    %v184 = vadd.f32 0.0, %v183
    %v185 = vpop.f32.mrf.mxu0
    %186 = vmatprep.mubr.f32.mxu0 0.0
    %v187 = vand.u32 %v53, 4294901760
    %v188 = vsub.f32 %v53, %v187
    %v189 = vand.u32 %v188, 4294901760
    %v190 = vsub.f32 %v188, %v189
    %v191 = vand.u32 %v190, 4294901760
    %192 = vmatmul.mubr.f32.gmra.mxu0 %v191
    %v193 = vpop.f32.mrf.mxu0
    %v194 = vadd.f32 0.0, %v193
    %v195 = vpop.f32.mrf.mxu0
    %196 = vmatprep.mubr.f32.mxu0 0.0
    %v197 = vand.u32 %v54, 4294901760
    %v198 = vsub.f32 %v54, %v197
    %v199 = vand.u32 %v198, 4294901760
    %v200 = vsub.f32 %v198, %v199
    %v201 = vand.u32 %v200, 4294901760
    %202 = vmatmul.mubr.f32.gmra.mxu0 %v201
    %v203 = vpop.f32.mrf.mxu0
    %v204 = vadd.f32 0.0, %v203
    %v205 = vpop.f32.mrf.mxu0
    %206 = vmatprep.mubr.f32.mxu0 0.0
    %v207 = vand.u32 %v55, 4294901760
    %v208 = vsub.f32 %v55, %v207
    %v209 = vand.u32 %v208, 4294901760
    %v210 = vsub.f32 %v208, %v209
    %v211 = vand.u32 %v210, 4294901760
    %212 = vmatmul.mubr.f32.gmra.mxu0 %v211
    %v213 = vpop.f32.mrf.mxu0
    %v214 = vadd.f32 0.0, %v213
    %v215 = vpop.f32.mrf.mxu0
    %216 = vmatprep.mubr.f32.mxu0 0.0
    %v217 = vand.u32 %v56, 4294901760
    %v218 = vsub.f32 %v56, %v217
    %v219 = vand.u32 %v218, 4294901760
    %v220 = vsub.f32 %v218, %v219
    %v221 = vand.u32 %v220, 4294901760
    %222 = vmatmul.mubr.f32.gmra.mxu0 %v221
    %v223 = vpop.f32.mrf.mxu0
    %v224 = vadd.f32 0.0, %v223
    %v225 = vpop.f32.mrf.mxu0
    %226 = vmatprep.mubr.f32.mxu0 0.0
    %v227 = vand.u32 %v57, 4294901760
    %v228 = vsub.f32 %v57, %v227
    %v229 = vand.u32 %v228, 4294901760
    %v230 = vsub.f32 %v228, %v229
    %v231 = vand.u32 %v230, 4294901760
    %232 = vmatmul.mubr.f32.gmra.mxu0 %v231
    %v233 = vpop.f32.mrf.mxu0
    %v234 = vadd.f32 0.0, %v233
    %v235 = vpop.f32.mrf.mxu0
    %236 = vmatprep.mubr.f32.mxu0 0.0
    %v237 = vand.u32 %v58, 4294901760
    %v238 = vsub.f32 %v58, %v237
    %v239 = vand.u32 %v238, 4294901760
    %v240 = vsub.f32 %v238, %v239
    %v241 = vand.u32 %v240, 4294901760
    %242 = vmatmul.mubr.f32.gmra.mxu0 %v241
    %v243 = vpop.f32.mrf.mxu0
    %v244 = vadd.f32 0.0, %v243
    %v245 = vpop.f32.mrf.mxu0
    %246 = vmatprep.mubr.f32.mxu0 0.0
    %v247 = vand.u32 %v59, 4294901760
    %v248 = vsub.f32 %v59, %v247
    %v249 = vand.u32 %v248, 4294901760
    %v250 = vsub.f32 %v248, %v249
    %v251 = vand.u32 %v250, 4294901760
    %252 = vmatmul.mubr.f32.gmra.mxu0 %v251
    %v253 = vpop.f32.mrf.mxu0
    %v254 = vadd.f32 0.0, %v253
    %v255 = vpop.f32.mrf.mxu0
    %256 = vdwg.mxu0
    %257 = vmatprep.subr.mxu0 0.0
    %v258 = vand.u32 %v75, 4294901760
    %v259 = vsub.f32 %v75, %v258
    %v260 = vand.u32 %v259, 4294901760
    %v261 = vsub.f32 %v259, %v260
    %v262 = vand.u32 %v261, 4294901760
    %263 = vmatpush1.msra.mxu0 %v262
    %264 = vmatprep.subr.mxu0 0.0
    %v265 = vand.u32 %v74, 4294901760
    %v266 = vsub.f32 %v74, %v265
    %v267 = vand.u32 %v266, 4294901760
    %v268 = vsub.f32 %v266, %v267
    %v269 = vand.u32 %v268, 4294901760
    %270 = vmatpush1.msra.mxu0 %v269
    %271 = vmatprep.subr.mxu0 0.0
    %v272 = vand.u32 %v73, 4294901760
    %v273 = vsub.f32 %v73, %v272
    %v274 = vand.u32 %v273, 4294901760
    %v275 = vsub.f32 %v273, %v274
    %v276 = vand.u32 %v275, 4294901760
    %277 = vmatpush1.msra.mxu0 %v276
    %278 = vmatprep.subr.mxu0 0.0
    %v279 = vand.u32 %v72, 4294901760
    %v280 = vsub.f32 %v72, %v279
    %v281 = vand.u32 %v280, 4294901760
    %v282 = vsub.f32 %v280, %v281
    %v283 = vand.u32 %v282, 4294901760
    %284 = vmatpush1.msra.mxu0 %v283
    %285 = vmatprep.subr.mxu0 0.0
    %v286 = vand.u32 %v71, 4294901760
    %v287 = vsub.f32 %v71, %v286
    %v288 = vand.u32 %v287, 4294901760
    %v289 = vsub.f32 %v287, %v288
    %v290 = vand.u32 %v289, 4294901760
    %291 = vmatpush1.msra.mxu0 %v290
    %292 = vmatprep.subr.mxu0 0.0
    %v293 = vand.u32 %v70, 4294901760
    %v294 = vsub.f32 %v70, %v293
    %v295 = vand.u32 %v294, 4294901760
    %v296 = vsub.f32 %v294, %v295
    %v297 = vand.u32 %v296, 4294901760
    %298 = vmatpush1.msra.mxu0 %v297
    %299 = vmatprep.subr.mxu0 0.0
    %v300 = vand.u32 %v69, 4294901760
    %v301 = vsub.f32 %v69, %v300
    %v302 = vand.u32 %v301, 4294901760
    %v303 = vsub.f32 %v301, %v302
    %v304 = vand.u32 %v303, 4294901760
    %305 = vmatpush1.msra.mxu0 %v304
    %306 = vmatprep.subr.mxu0 0.0
    %v307 = vand.u32 %v68, 4294901760
    %v308 = vsub.f32 %v68, %v307
    %v309 = vand.u32 %v308, 4294901760
    %v310 = vsub.f32 %v308, %v309
    %v311 = vand.u32 %v310, 4294901760
    %312 = vmatpush1.msra.mxu0 %v311
    %313 = vmatprep.subr.mxu0 0.0
    %v314 = vand.u32 %v67, 4294901760
    %v315 = vsub.f32 %v67, %v314
    %v316 = vand.u32 %v315, 4294901760
    %v317 = vsub.f32 %v315, %v316
    %v318 = vand.u32 %v317, 4294901760
    %319 = vmatpush1.msra.mxu0 %v318
    %320 = vmatprep.subr.mxu0 0.0
    %v321 = vand.u32 %v66, 4294901760
    %v322 = vsub.f32 %v66, %v321
    %v323 = vand.u32 %v322, 4294901760
    %v324 = vsub.f32 %v322, %v323
    %v325 = vand.u32 %v324, 4294901760
    %326 = vmatpush1.msra.mxu0 %v325
    %327 = vmatprep.subr.mxu0 0.0
    %v328 = vand.u32 %v65, 4294901760
    %v329 = vsub.f32 %v65, %v328
    %v330 = vand.u32 %v329, 4294901760
    %v331 = vsub.f32 %v329, %v330
    %v332 = vand.u32 %v331, 4294901760
    %333 = vmatpush1.msra.mxu0 %v332
    %334 = vmatprep.subr.mxu0 0.0
    %v335 = vand.u32 %v64, 4294901760
    %v336 = vsub.f32 %v64, %v335
    %v337 = vand.u32 %v336, 4294901760
    %v338 = vsub.f32 %v336, %v337
    %v339 = vand.u32 %v338, 4294901760
    %340 = vmatpush1.msra.mxu0 %v339
    %341 = vmatprep.subr.mxu0 0.0
    %v342 = vand.u32 %v63, 4294901760
    %v343 = vsub.f32 %v63, %v342
    %v344 = vand.u32 %v343, 4294901760
    %v345 = vsub.f32 %v343, %v344
    %v346 = vand.u32 %v345, 4294901760
    %347 = vmatpush1.msra.mxu0 %v346
    %348 = vmatprep.subr.mxu0 0.0
    %v349 = vand.u32 %v62, 4294901760
    %v350 = vsub.f32 %v62, %v349
    %v351 = vand.u32 %v350, 4294901760
    %v352 = vsub.f32 %v350, %v351
    %v353 = vand.u32 %v352, 4294901760
    %354 = vmatpush1.msra.mxu0 %v353
    %355 = vmatprep.subr.mxu0 0.0
    %v356 = vand.u32 %v61, 4294901760
    %v357 = vsub.f32 %v61, %v356
    %v358 = vand.u32 %v357, 4294901760
    %v359 = vsub.f32 %v357, %v358
    %v360 = vand.u32 %v359, 4294901760
    %361 = vmatpush1.msra.mxu0 %v360
    %362 = vmatprep.subr.mxu0 0.0
    %v363 = vand.u32 %v60, 4294901760
    %v364 = vsub.f32 %v60, %v363
    %v365 = vand.u32 %v364, 4294901760
    %v366 = vsub.f32 %v364, %v365
    %v367 = vand.u32 %v366, 4294901760
    %368 = vmatpush1.msra.mxu0 %v367
    %369 = vmatprep.subr.mxu0 0.0
    %370 = vmatpush2.msra.mxu0 0.0
    %371 = vmatprep.subr.mxu0 0.0
    %372 = vmatpush2.msra.mxu0 0.0
    %373 = vmatprep.subr.mxu0 0.0
    %374 = vmatpush2.msra.mxu0 0.0
    %375 = vmatprep.subr.mxu0 0.0
    %376 = vmatpush2.msra.mxu0 0.0
    %377 = vmatprep.subr.mxu0 0.0
    %378 = vmatpush2.msra.mxu0 0.0
    %379 = vmatprep.subr.mxu0 0.0
    %380 = vmatpush2.msra.mxu0 0.0
    %381 = vmatprep.subr.mxu0 0.0
    %382 = vmatpush2.msra.mxu0 0.0
    %383 = vmatprep.subr.mxu0 0.0
    %384 = vmatpush2.msra.mxu0 0.0
    %385 = vmatprep.subr.mxu0 0.0
    %386 = vmatpush2.msra.mxu0 0.0
    %387 = vmatprep.subr.mxu0 0.0
    %388 = vmatpush2.msra.mxu0 0.0
    %389 = vmatprep.subr.mxu0 0.0
    %390 = vmatpush2.msra.mxu0 0.0
    %391 = vmatprep.subr.mxu0 0.0
    %392 = vmatpush2.msra.mxu0 0.0
    %393 = vmatprep.subr.mxu0 0.0
    %394 = vmatpush2.msra.mxu0 0.0
    %395 = vmatprep.subr.mxu0 0.0
    %396 = vmatpush2.msra.mxu0 0.0
    %397 = vmatprep.subr.mxu0 0.0
    %398 = vmatpush2.msra.mxu0 0.0
    %399 = vmatprep.subr.mxu0 0.0
    %400 = vmatpush2.msra.mxu0 0.0
    %401 = vmatprep.mubr.f32.mxu0 0.0
    %v402 = vand.u32 %v50, 4294901760
    %403 = vmatmul.mubr.f32.gmra.mxu0 %v402
    %v404 = vpop.f32.mrf.mxu0
    %v405 = vadd.f32 %v164, %v404
    %v406 = vpop.f32.mrf.mxu0
    %407 = vmatprep.mubr.f32.mxu0 0.0
    %v408 = vand.u32 %v51, 4294901760
    %409 = vmatmul.mubr.f32.gmra.mxu0 %v408
    %v410 = vpop.f32.mrf.mxu0
    %v411 = vadd.f32 %v174, %v410
    %v412 = vpop.f32.mrf.mxu0
    %413 = vmatprep.mubr.f32.mxu0 0.0
    %v414 = vand.u32 %v52, 4294901760
    %415 = vmatmul.mubr.f32.gmra.mxu0 %v414
    %v416 = vpop.f32.mrf.mxu0
    %v417 = vadd.f32 %v184, %v416
    %v418 = vpop.f32.mrf.mxu0
    %419 = vmatprep.mubr.f32.mxu0 0.0
    %v420 = vand.u32 %v53, 4294901760
    %421 = vmatmul.mubr.f32.gmra.mxu0 %v420
    %v422 = vpop.f32.mrf.mxu0
    %v423 = vadd.f32 %v194, %v422
    %v424 = vpop.f32.mrf.mxu0
    %425 = vmatprep.mubr.f32.mxu0 0.0
    %v426 = vand.u32 %v54, 4294901760
    %427 = vmatmul.mubr.f32.gmra.mxu0 %v426
    %v428 = vpop.f32.mrf.mxu0
    %v429 = vadd.f32 %v204, %v428
    %v430 = vpop.f32.mrf.mxu0
    %431 = vmatprep.mubr.f32.mxu0 0.0
    %v432 = vand.u32 %v55, 4294901760
    %433 = vmatmul.mubr.f32.gmra.mxu0 %v432
    %v434 = vpop.f32.mrf.mxu0
    %v435 = vadd.f32 %v214, %v434
    %v436 = vpop.f32.mrf.mxu0
    %437 = vmatprep.mubr.f32.mxu0 0.0
    %v438 = vand.u32 %v56, 4294901760
    %439 = vmatmul.mubr.f32.gmra.mxu0 %v438
    %v440 = vpop.f32.mrf.mxu0
    %v441 = vadd.f32 %v224, %v440
    %v442 = vpop.f32.mrf.mxu0
    %443 = vmatprep.mubr.f32.mxu0 0.0
    %v444 = vand.u32 %v57, 4294901760
    %445 = vmatmul.mubr.f32.gmra.mxu0 %v444
    %v446 = vpop.f32.mrf.mxu0
    %v447 = vadd.f32 %v234, %v446
    %v448 = vpop.f32.mrf.mxu0
    %449 = vmatprep.mubr.f32.mxu0 0.0
    %v450 = vand.u32 %v58, 4294901760
    %451 = vmatmul.mubr.f32.gmra.mxu0 %v450
    %v452 = vpop.f32.mrf.mxu0
    %v453 = vadd.f32 %v244, %v452
    %v454 = vpop.f32.mrf.mxu0
    %455 = vmatprep.mubr.f32.mxu0 0.0
    %v456 = vand.u32 %v59, 4294901760
    %457 = vmatmul.mubr.f32.gmra.mxu0 %v456
    %v458 = vpop.f32.mrf.mxu0
    %v459 = vadd.f32 %v254, %v458
    %v460 = vpop.f32.mrf.mxu0
    %461 = vdwg.mxu0
    %462 = vmatprep.subr.mxu0 0.0
    %v463 = vand.u32 %v75, 4294901760
    %v464 = vsub.f32 %v75, %v463
    %465 = vmatpush1.msra.mxu0 %v464
    %466 = vmatprep.subr.mxu0 0.0
    %v467 = vand.u32 %v74, 4294901760
    %v468 = vsub.f32 %v74, %v467
    %469 = vmatpush1.msra.mxu0 %v468
    %470 = vmatprep.subr.mxu0 0.0
    %v471 = vand.u32 %v73, 4294901760
    %v472 = vsub.f32 %v73, %v471
    %473 = vmatpush1.msra.mxu0 %v472
    %474 = vmatprep.subr.mxu0 0.0
    %v475 = vand.u32 %v72, 4294901760
    %v476 = vsub.f32 %v72, %v475
    %477 = vmatpush1.msra.mxu0 %v476
    %478 = vmatprep.subr.mxu0 0.0
    %v479 = vand.u32 %v71, 4294901760
    %v480 = vsub.f32 %v71, %v479
    %481 = vmatpush1.msra.mxu0 %v480
    %482 = vmatprep.subr.mxu0 0.0
    %v483 = vand.u32 %v70, 4294901760
    %v484 = vsub.f32 %v70, %v483
    %485 = vmatpush1.msra.mxu0 %v484
    %486 = vmatprep.subr.mxu0 0.0
    %v487 = vand.u32 %v69, 4294901760
    %v488 = vsub.f32 %v69, %v487
    %489 = vmatpush1.msra.mxu0 %v488
    %490 = vmatprep.subr.mxu0 0.0
    %v491 = vand.u32 %v68, 4294901760
    %v492 = vsub.f32 %v68, %v491
    %493 = vmatpush1.msra.mxu0 %v492
    %494 = vmatprep.subr.mxu0 0.0
    %v495 = vand.u32 %v67, 4294901760
    %v496 = vsub.f32 %v67, %v495
    %497 = vmatpush1.msra.mxu0 %v496
    %498 = vmatprep.subr.mxu0 0.0
    %v499 = vand.u32 %v66, 4294901760
    %v500 = vsub.f32 %v66, %v499
    %501 = vmatpush1.msra.mxu0 %v500
    %502 = vmatprep.subr.mxu0 0.0
    %v503 = vand.u32 %v65, 4294901760
    %v504 = vsub.f32 %v65, %v503
    %505 = vmatpush1.msra.mxu0 %v504
    %506 = vmatprep.subr.mxu0 0.0
    %v507 = vand.u32 %v64, 4294901760
    %v508 = vsub.f32 %v64, %v507
    %509 = vmatpush1.msra.mxu0 %v508
    %510 = vmatprep.subr.mxu0 0.0
    %v511 = vand.u32 %v63, 4294901760
    %v512 = vsub.f32 %v63, %v511
    %513 = vmatpush1.msra.mxu0 %v512
    %514 = vmatprep.subr.mxu0 0.0
    %v515 = vand.u32 %v62, 4294901760
    %v516 = vsub.f32 %v62, %v515
    %517 = vmatpush1.msra.mxu0 %v516
    %518 = vmatprep.subr.mxu0 0.0
    %v519 = vand.u32 %v61, 4294901760
    %v520 = vsub.f32 %v61, %v519
    %521 = vmatpush1.msra.mxu0 %v520
    %522 = vmatprep.subr.mxu0 0.0
    %v523 = vand.u32 %v60, 4294901760
    %v524 = vsub.f32 %v60, %v523
    %525 = vmatpush1.msra.mxu0 %v524
    %526 = vmatprep.subr.mxu0 0.0
    %527 = vmatpush2.msra.mxu0 0.0
    %528 = vmatprep.subr.mxu0 0.0
    %529 = vmatpush2.msra.mxu0 0.0
    %530 = vmatprep.subr.mxu0 0.0
    %531 = vmatpush2.msra.mxu0 0.0
    %532 = vmatprep.subr.mxu0 0.0
    %533 = vmatpush2.msra.mxu0 0.0
    %534 = vmatprep.subr.mxu0 0.0
    %535 = vmatpush2.msra.mxu0 0.0
    %536 = vmatprep.subr.mxu0 0.0
    %537 = vmatpush2.msra.mxu0 0.0
    %538 = vmatprep.subr.mxu0 0.0
    %539 = vmatpush2.msra.mxu0 0.0
    %540 = vmatprep.subr.mxu0 0.0
    %541 = vmatpush2.msra.mxu0 0.0
    %542 = vmatprep.subr.mxu0 0.0
    %543 = vmatpush2.msra.mxu0 0.0
    %544 = vmatprep.subr.mxu0 0.0
    %545 = vmatpush2.msra.mxu0 0.0
    %546 = vmatprep.subr.mxu0 0.0
    %547 = vmatpush2.msra.mxu0 0.0
    %548 = vmatprep.subr.mxu0 0.0
    %549 = vmatpush2.msra.mxu0 0.0
    %550 = vmatprep.subr.mxu0 0.0
    %551 = vmatpush2.msra.mxu0 0.0
    %552 = vmatprep.subr.mxu0 0.0
    %553 = vmatpush2.msra.mxu0 0.0
    %554 = vmatprep.subr.mxu0 0.0
    %555 = vmatpush2.msra.mxu0 0.0
    %556 = vmatprep.subr.mxu0 0.0
    %557 = vmatpush2.msra.mxu0 0.0
    %558 = vmatprep.mubr.f32.mxu0 0.0
    %v559 = vand.u32 %v50, 4294901760
    %v560 = vsub.f32 %v50, %v559
    %561 = vmatmul.mubr.f32.gmra.mxu0 %v560
    %v562 = vpop.f32.mrf.mxu0
    %v563 = vadd.f32 %v405, %v562
    %v564 = vpop.f32.mrf.mxu0
    %565 = vmatprep.mubr.f32.mxu0 0.0
    %v566 = vand.u32 %v51, 4294901760
    %v567 = vsub.f32 %v51, %v566
    %568 = vmatmul.mubr.f32.gmra.mxu0 %v567
    %v569 = vpop.f32.mrf.mxu0
    %v570 = vadd.f32 %v411, %v569
    %v571 = vpop.f32.mrf.mxu0
    %572 = vmatprep.mubr.f32.mxu0 0.0
    %v573 = vand.u32 %v52, 4294901760
    %v574 = vsub.f32 %v52, %v573
    %575 = vmatmul.mubr.f32.gmra.mxu0 %v574
    %v576 = vpop.f32.mrf.mxu0
    %v577 = vadd.f32 %v417, %v576
    %v578 = vpop.f32.mrf.mxu0
    %579 = vmatprep.mubr.f32.mxu0 0.0
    %v580 = vand.u32 %v53, 4294901760
    %v581 = vsub.f32 %v53, %v580
    %582 = vmatmul.mubr.f32.gmra.mxu0 %v581
    %v583 = vpop.f32.mrf.mxu0
    %v584 = vadd.f32 %v423, %v583
    %v585 = vpop.f32.mrf.mxu0
    %586 = vmatprep.mubr.f32.mxu0 0.0
    %v587 = vand.u32 %v54, 4294901760
    %v588 = vsub.f32 %v54, %v587
    %589 = vmatmul.mubr.f32.gmra.mxu0 %v588
    %v590 = vpop.f32.mrf.mxu0
    %v591 = vadd.f32 %v429, %v590
    %v592 = vpop.f32.mrf.mxu0
    %593 = vmatprep.mubr.f32.mxu0 0.0
    %v594 = vand.u32 %v55, 4294901760
    %v595 = vsub.f32 %v55, %v594
    %596 = vmatmul.mubr.f32.gmra.mxu0 %v595
    %v597 = vpop.f32.mrf.mxu0
    %v598 = vadd.f32 %v435, %v597
    %v599 = vpop.f32.mrf.mxu0
    %600 = vmatprep.mubr.f32.mxu0 0.0
    %v601 = vand.u32 %v56, 4294901760
    %v602 = vsub.f32 %v56, %v601
    %603 = vmatmul.mubr.f32.gmra.mxu0 %v602
    %v604 = vpop.f32.mrf.mxu0
    %v605 = vadd.f32 %v441, %v604
    %v606 = vpop.f32.mrf.mxu0
    %607 = vmatprep.mubr.f32.mxu0 0.0
    %v608 = vand.u32 %v57, 4294901760
    %v609 = vsub.f32 %v57, %v608
    %610 = vmatmul.mubr.f32.gmra.mxu0 %v609
    %v611 = vpop.f32.mrf.mxu0
    %v612 = vadd.f32 %v447, %v611
    %v613 = vpop.f32.mrf.mxu0
    %614 = vmatprep.mubr.f32.mxu0 0.0
    %v615 = vand.u32 %v58, 4294901760
    %v616 = vsub.f32 %v58, %v615
    %617 = vmatmul.mubr.f32.gmra.mxu0 %v616
    %v618 = vpop.f32.mrf.mxu0
    %v619 = vadd.f32 %v453, %v618
    %v620 = vpop.f32.mrf.mxu0
    %621 = vmatprep.mubr.f32.mxu0 0.0
    %v622 = vand.u32 %v59, 4294901760
    %v623 = vsub.f32 %v59, %v622
    %624 = vmatmul.mubr.f32.gmra.mxu0 %v623
    %v625 = vpop.f32.mrf.mxu0
    %v626 = vadd.f32 %v459, %v625
    %v627 = vpop.f32.mrf.mxu0
    %628 = vdwg.mxu0
    %629 = vmatprep.subr.mxu0 0.0
    %v630 = vand.u32 %v75, 4294901760
    %631 = vmatpush1.msra.mxu0 %v630
    %632 = vmatprep.subr.mxu0 0.0
    %v633 = vand.u32 %v74, 4294901760
    %634 = vmatpush1.msra.mxu0 %v633
    %635 = vmatprep.subr.mxu0 0.0
    %v636 = vand.u32 %v73, 4294901760
    %637 = vmatpush1.msra.mxu0 %v636
    %638 = vmatprep.subr.mxu0 0.0
    %v639 = vand.u32 %v72, 4294901760
    %640 = vmatpush1.msra.mxu0 %v639
    %641 = vmatprep.subr.mxu0 0.0
    %v642 = vand.u32 %v71, 4294901760
    %643 = vmatpush1.msra.mxu0 %v642
    %644 = vmatprep.subr.mxu0 0.0
    %v645 = vand.u32 %v70, 4294901760
    %646 = vmatpush1.msra.mxu0 %v645
    %647 = vmatprep.subr.mxu0 0.0
    %v648 = vand.u32 %v69, 4294901760
    %649 = vmatpush1.msra.mxu0 %v648
    %650 = vmatprep.subr.mxu0 0.0
    %v651 = vand.u32 %v68, 4294901760
    %652 = vmatpush1.msra.mxu0 %v651
    %653 = vmatprep.subr.mxu0 0.0
    %v654 = vand.u32 %v67, 4294901760
    %655 = vmatpush1.msra.mxu0 %v654
    %656 = vmatprep.subr.mxu0 0.0
    %v657 = vand.u32 %v66, 4294901760
    %658 = vmatpush1.msra.mxu0 %v657
    %659 = vmatprep.subr.mxu0 0.0
    %v660 = vand.u32 %v65, 4294901760
    %661 = vmatpush1.msra.mxu0 %v660
    %662 = vmatprep.subr.mxu0 0.0
    %v663 = vand.u32 %v64, 4294901760
    %664 = vmatpush1.msra.mxu0 %v663
    %665 = vmatprep.subr.mxu0 0.0
    %v666 = vand.u32 %v63, 4294901760
    %667 = vmatpush1.msra.mxu0 %v666
    %668 = vmatprep.subr.mxu0 0.0
    %v669 = vand.u32 %v62, 4294901760
    %670 = vmatpush1.msra.mxu0 %v669
    %671 = vmatprep.subr.mxu0 0.0
    %v672 = vand.u32 %v61, 4294901760
    %673 = vmatpush1.msra.mxu0 %v672
    %674 = vmatprep.subr.mxu0 0.0
    %v675 = vand.u32 %v60, 4294901760
    %676 = vmatpush1.msra.mxu0 %v675
    %677 = vmatprep.subr.mxu0 0.0
    %678 = vmatpush2.msra.mxu0 0.0
    %679 = vmatprep.subr.mxu0 0.0
    %680 = vmatpush2.msra.mxu0 0.0
    %681 = vmatprep.subr.mxu0 0.0
    %682 = vmatpush2.msra.mxu0 0.0
    %683 = vmatprep.subr.mxu0 0.0
    %684 = vmatpush2.msra.mxu0 0.0
    %685 = vmatprep.subr.mxu0 0.0
    %686 = vmatpush2.msra.mxu0 0.0
    %687 = vmatprep.subr.mxu0 0.0
    %688 = vmatpush2.msra.mxu0 0.0
    %689 = vmatprep.subr.mxu0 0.0
    %690 = vmatpush2.msra.mxu0 0.0
    %691 = vmatprep.subr.mxu0 0.0
    %692 = vmatpush2.msra.mxu0 0.0
    %693 = vmatprep.subr.mxu0 0.0
    %694 = vmatpush2.msra.mxu0 0.0
    %695 = vmatprep.subr.mxu0 0.0
    %696 = vmatpush2.msra.mxu0 0.0
    %697 = vmatprep.subr.mxu0 0.0
    %698 = vmatpush2.msra.mxu0 0.0
    %699 = vmatprep.subr.mxu0 0.0
    %700 = vmatpush2.msra.mxu0 0.0
    %701 = vmatprep.subr.mxu0 0.0
    %702 = vmatpush2.msra.mxu0 0.0
    %703 = vmatprep.subr.mxu0 0.0
    %704 = vmatpush2.msra.mxu0 0.0
    %705 = vmatprep.subr.mxu0 0.0
    %706 = vmatpush2.msra.mxu0 0.0
    %707 = vmatprep.subr.mxu0 0.0
    %708 = vmatpush2.msra.mxu0 0.0
    %709 = vmatprep.mubr.f32.mxu0 0.0
    %v710 = vand.u32 %v50, 4294901760
    %v711 = vsub.f32 %v50, %v710
    %v712 = vand.u32 %v711, 4294901760
    %713 = vmatmul.mubr.f32.gmra.mxu0 %v712
    %v714 = vpop.f32.mrf.mxu0
    %v715 = vadd.f32 %v563, %v714
    %v716 = vpop.f32.mrf.mxu0
    %717 = vmatprep.mubr.f32.mxu0 0.0
    %v718 = vand.u32 %v51, 4294901760
    %v719 = vsub.f32 %v51, %v718
    %v720 = vand.u32 %v719, 4294901760
    %721 = vmatmul.mubr.f32.gmra.mxu0 %v720
    %v722 = vpop.f32.mrf.mxu0
    %v723 = vadd.f32 %v570, %v722
    %v724 = vpop.f32.mrf.mxu0
    %725 = vmatprep.mubr.f32.mxu0 0.0
    %v726 = vand.u32 %v52, 4294901760
    %v727 = vsub.f32 %v52, %v726
    %v728 = vand.u32 %v727, 4294901760
    %729 = vmatmul.mubr.f32.gmra.mxu0 %v728
    %v730 = vpop.f32.mrf.mxu0
    %v731 = vadd.f32 %v577, %v730
    %v732 = vpop.f32.mrf.mxu0
    %733 = vmatprep.mubr.f32.mxu0 0.0
    %v734 = vand.u32 %v53, 4294901760
    %v735 = vsub.f32 %v53, %v734
    %v736 = vand.u32 %v735, 4294901760
    %737 = vmatmul.mubr.f32.gmra.mxu0 %v736
    %v738 = vpop.f32.mrf.mxu0
    %v739 = vadd.f32 %v584, %v738
    %v740 = vpop.f32.mrf.mxu0
    %741 = vmatprep.mubr.f32.mxu0 0.0
    %v742 = vand.u32 %v54, 4294901760
    %v743 = vsub.f32 %v54, %v742
    %v744 = vand.u32 %v743, 4294901760
    %745 = vmatmul.mubr.f32.gmra.mxu0 %v744
    %v746 = vpop.f32.mrf.mxu0
    %v747 = vadd.f32 %v591, %v746
    %v748 = vpop.f32.mrf.mxu0
    %749 = vmatprep.mubr.f32.mxu0 0.0
    %v750 = vand.u32 %v55, 4294901760
    %v751 = vsub.f32 %v55, %v750
    %v752 = vand.u32 %v751, 4294901760
    %753 = vmatmul.mubr.f32.gmra.mxu0 %v752
    %v754 = vpop.f32.mrf.mxu0
    %v755 = vadd.f32 %v598, %v754
    %v756 = vpop.f32.mrf.mxu0
    %757 = vmatprep.mubr.f32.mxu0 0.0
    %v758 = vand.u32 %v56, 4294901760
    %v759 = vsub.f32 %v56, %v758
    %v760 = vand.u32 %v759, 4294901760
    %761 = vmatmul.mubr.f32.gmra.mxu0 %v760
    %v762 = vpop.f32.mrf.mxu0
    %v763 = vadd.f32 %v605, %v762
    %v764 = vpop.f32.mrf.mxu0
    %765 = vmatprep.mubr.f32.mxu0 0.0
    %v766 = vand.u32 %v57, 4294901760
    %v767 = vsub.f32 %v57, %v766
    %v768 = vand.u32 %v767, 4294901760
    %769 = vmatmul.mubr.f32.gmra.mxu0 %v768
    %v770 = vpop.f32.mrf.mxu0
    %v771 = vadd.f32 %v612, %v770
    %v772 = vpop.f32.mrf.mxu0
    %773 = vmatprep.mubr.f32.mxu0 0.0
    %v774 = vand.u32 %v58, 4294901760
    %v775 = vsub.f32 %v58, %v774
    %v776 = vand.u32 %v775, 4294901760
    %777 = vmatmul.mubr.f32.gmra.mxu0 %v776
    %v778 = vpop.f32.mrf.mxu0
    %v779 = vadd.f32 %v619, %v778
    %v780 = vpop.f32.mrf.mxu0
    %781 = vmatprep.mubr.f32.mxu0 0.0
    %v782 = vand.u32 %v59, 4294901760
    %v783 = vsub.f32 %v59, %v782
    %v784 = vand.u32 %v783, 4294901760
    %785 = vmatmul.mubr.f32.gmra.mxu0 %v784
    %v786 = vpop.f32.mrf.mxu0
    %v787 = vadd.f32 %v626, %v786
    %v788 = vpop.f32.mrf.mxu0
    %789 = vdwg.mxu0
    %790 = vmatprep.subr.mxu0 0.0
    %v791 = vand.u32 %v75, 4294901760
    %v792 = vsub.f32 %v75, %v791
    %v793 = vand.u32 %v792, 4294901760
    %794 = vmatpush1.msra.mxu0 %v793
    %795 = vmatprep.subr.mxu0 0.0
    %v796 = vand.u32 %v74, 4294901760
    %v797 = vsub.f32 %v74, %v796
    %v798 = vand.u32 %v797, 4294901760
    %799 = vmatpush1.msra.mxu0 %v798
    %800 = vmatprep.subr.mxu0 0.0
    %v801 = vand.u32 %v73, 4294901760
    %v802 = vsub.f32 %v73, %v801
    %v803 = vand.u32 %v802, 4294901760
    %804 = vmatpush1.msra.mxu0 %v803
    %805 = vmatprep.subr.mxu0 0.0
    %v806 = vand.u32 %v72, 4294901760
    %v807 = vsub.f32 %v72, %v806
    %v808 = vand.u32 %v807, 4294901760
    %809 = vmatpush1.msra.mxu0 %v808
    %810 = vmatprep.subr.mxu0 0.0
    %v811 = vand.u32 %v71, 4294901760
    %v812 = vsub.f32 %v71, %v811
    %v813 = vand.u32 %v812, 4294901760
    %814 = vmatpush1.msra.mxu0 %v813
    %815 = vmatprep.subr.mxu0 0.0
    %v816 = vand.u32 %v70, 4294901760
    %v817 = vsub.f32 %v70, %v816
    %v818 = vand.u32 %v817, 4294901760
    %819 = vmatpush1.msra.mxu0 %v818
    %820 = vmatprep.subr.mxu0 0.0
    %v821 = vand.u32 %v69, 4294901760
    %v822 = vsub.f32 %v69, %v821
    %v823 = vand.u32 %v822, 4294901760
    %824 = vmatpush1.msra.mxu0 %v823
    %825 = vmatprep.subr.mxu0 0.0
    %v826 = vand.u32 %v68, 4294901760
    %v827 = vsub.f32 %v68, %v826
    %v828 = vand.u32 %v827, 4294901760
    %829 = vmatpush1.msra.mxu0 %v828
    %830 = vmatprep.subr.mxu0 0.0
    %v831 = vand.u32 %v67, 4294901760
    %v832 = vsub.f32 %v67, %v831
    %v833 = vand.u32 %v832, 4294901760
    %834 = vmatpush1.msra.mxu0 %v833
    %835 = vmatprep.subr.mxu0 0.0
    %v836 = vand.u32 %v66, 4294901760
    %v837 = vsub.f32 %v66, %v836
    %v838 = vand.u32 %v837, 4294901760
    %839 = vmatpush1.msra.mxu0 %v838
    %840 = vmatprep.subr.mxu0 0.0
    %v841 = vand.u32 %v65, 4294901760
    %v842 = vsub.f32 %v65, %v841
    %v843 = vand.u32 %v842, 4294901760
    %844 = vmatpush1.msra.mxu0 %v843
    %845 = vmatprep.subr.mxu0 0.0
    %v846 = vand.u32 %v64, 4294901760
    %v847 = vsub.f32 %v64, %v846
    %v848 = vand.u32 %v847, 4294901760
    %849 = vmatpush1.msra.mxu0 %v848
    %850 = vmatprep.subr.mxu0 0.0
    %v851 = vand.u32 %v63, 4294901760
    %v852 = vsub.f32 %v63, %v851
    %v853 = vand.u32 %v852, 4294901760
    %854 = vmatpush1.msra.mxu0 %v853
    %855 = vmatprep.subr.mxu0 0.0
    %v856 = vand.u32 %v62, 4294901760
    %v857 = vsub.f32 %v62, %v856
    %v858 = vand.u32 %v857, 4294901760
    %859 = vmatpush1.msra.mxu0 %v858
    %860 = vmatprep.subr.mxu0 0.0
    %v861 = vand.u32 %v61, 4294901760
    %v862 = vsub.f32 %v61, %v861
    %v863 = vand.u32 %v862, 4294901760
    %864 = vmatpush1.msra.mxu0 %v863
    %865 = vmatprep.subr.mxu0 0.0
    %v866 = vand.u32 %v60, 4294901760
    %v867 = vsub.f32 %v60, %v866
    %v868 = vand.u32 %v867, 4294901760
    %869 = vmatpush1.msra.mxu0 %v868
    %870 = vmatprep.subr.mxu0 0.0
    %871 = vmatpush2.msra.mxu0 0.0
    %872 = vmatprep.subr.mxu0 0.0
    %873 = vmatpush2.msra.mxu0 0.0
    %874 = vmatprep.subr.mxu0 0.0
    %875 = vmatpush2.msra.mxu0 0.0
    %876 = vmatprep.subr.mxu0 0.0
    %877 = vmatpush2.msra.mxu0 0.0
    %878 = vmatprep.subr.mxu0 0.0
    %879 = vmatpush2.msra.mxu0 0.0
    %880 = vmatprep.subr.mxu0 0.0
    %881 = vmatpush2.msra.mxu0 0.0
    %882 = vmatprep.subr.mxu0 0.0
    %883 = vmatpush2.msra.mxu0 0.0
    %884 = vmatprep.subr.mxu0 0.0
    %885 = vmatpush2.msra.mxu0 0.0
    %886 = vmatprep.subr.mxu0 0.0
    %887 = vmatpush2.msra.mxu0 0.0
    %888 = vmatprep.subr.mxu0 0.0
    %889 = vmatpush2.msra.mxu0 0.0
    %890 = vmatprep.subr.mxu0 0.0
    %891 = vmatpush2.msra.mxu0 0.0
    %892 = vmatprep.subr.mxu0 0.0
    %893 = vmatpush2.msra.mxu0 0.0
    %894 = vmatprep.subr.mxu0 0.0
    %895 = vmatpush2.msra.mxu0 0.0
    %896 = vmatprep.subr.mxu0 0.0
    %897 = vmatpush2.msra.mxu0 0.0
    %898 = vmatprep.subr.mxu0 0.0
    %899 = vmatpush2.msra.mxu0 0.0
    %900 = vmatprep.subr.mxu0 0.0
    %901 = vmatpush2.msra.mxu0 0.0
    %902 = vmatprep.mubr.f32.mxu0 0.0
    %v903 = vand.u32 %v50, 4294901760
    %904 = vmatmul.mubr.f32.gmra.mxu0 %v903
    %v905 = vpop.f32.mrf.mxu0
    %v906 = vadd.f32 %v715, %v905
    %v907 = vpop.f32.mrf.mxu0
    %908 = vmatprep.mubr.f32.mxu0 0.0
    %v909 = vand.u32 %v51, 4294901760
    %910 = vmatmul.mubr.f32.gmra.mxu0 %v909
    %v911 = vpop.f32.mrf.mxu0
    %v912 = vadd.f32 %v723, %v911
    %v913 = vpop.f32.mrf.mxu0
    %914 = vmatprep.mubr.f32.mxu0 0.0
    %v915 = vand.u32 %v52, 4294901760
    %916 = vmatmul.mubr.f32.gmra.mxu0 %v915
    %v917 = vpop.f32.mrf.mxu0
    %v918 = vadd.f32 %v731, %v917
    %v919 = vpop.f32.mrf.mxu0
    %920 = vmatprep.mubr.f32.mxu0 0.0
    %v921 = vand.u32 %v53, 4294901760
    %922 = vmatmul.mubr.f32.gmra.mxu0 %v921
    %v923 = vpop.f32.mrf.mxu0
    %v924 = vadd.f32 %v739, %v923
    %v925 = vpop.f32.mrf.mxu0
    %926 = vmatprep.mubr.f32.mxu0 0.0
    %v927 = vand.u32 %v54, 4294901760
    %928 = vmatmul.mubr.f32.gmra.mxu0 %v927
    %v929 = vpop.f32.mrf.mxu0
    %v930 = vadd.f32 %v747, %v929
    %v931 = vpop.f32.mrf.mxu0
    %932 = vmatprep.mubr.f32.mxu0 0.0
    %v933 = vand.u32 %v55, 4294901760
    %934 = vmatmul.mubr.f32.gmra.mxu0 %v933
    %v935 = vpop.f32.mrf.mxu0
    %v936 = vadd.f32 %v755, %v935
    %v937 = vpop.f32.mrf.mxu0
    %938 = vmatprep.mubr.f32.mxu0 0.0
    %v939 = vand.u32 %v56, 4294901760
    %940 = vmatmul.mubr.f32.gmra.mxu0 %v939
    %v941 = vpop.f32.mrf.mxu0
    %v942 = vadd.f32 %v763, %v941
    %v943 = vpop.f32.mrf.mxu0
    %944 = vmatprep.mubr.f32.mxu0 0.0
    %v945 = vand.u32 %v57, 4294901760
    %946 = vmatmul.mubr.f32.gmra.mxu0 %v945
    %v947 = vpop.f32.mrf.mxu0
    %v948 = vadd.f32 %v771, %v947
    %v949 = vpop.f32.mrf.mxu0
    %950 = vmatprep.mubr.f32.mxu0 0.0
    %v951 = vand.u32 %v58, 4294901760
    %952 = vmatmul.mubr.f32.gmra.mxu0 %v951
    %v953 = vpop.f32.mrf.mxu0
    %v954 = vadd.f32 %v779, %v953
    %v955 = vpop.f32.mrf.mxu0
    %956 = vmatprep.mubr.f32.mxu0 0.0
    %v957 = vand.u32 %v59, 4294901760
    %958 = vmatmul.mubr.f32.gmra.mxu0 %v957
    %v959 = vpop.f32.mrf.mxu0
    %v960 = vadd.f32 %v787, %v959
    %v961 = vpop.f32.mrf.mxu0
    %962 = vdwg.mxu0
    %963 = vmatprep.subr.mxu0 0.0
    %v964 = vand.u32 %v75, 4294901760
    %965 = vmatpush1.msra.mxu0 %v964
    %966 = vmatprep.subr.mxu0 0.0
    %v967 = vand.u32 %v74, 4294901760
    %968 = vmatpush1.msra.mxu0 %v967
    %969 = vmatprep.subr.mxu0 0.0
    %v970 = vand.u32 %v73, 4294901760
    %971 = vmatpush1.msra.mxu0 %v970
    %972 = vmatprep.subr.mxu0 0.0
    %v973 = vand.u32 %v72, 4294901760
    %974 = vmatpush1.msra.mxu0 %v973
    %975 = vmatprep.subr.mxu0 0.0
    %v976 = vand.u32 %v71, 4294901760
    %977 = vmatpush1.msra.mxu0 %v976
    %978 = vmatprep.subr.mxu0 0.0
    %v979 = vand.u32 %v70, 4294901760
    %980 = vmatpush1.msra.mxu0 %v979
    %981 = vmatprep.subr.mxu0 0.0
    %v982 = vand.u32 %v69, 4294901760
    %983 = vmatpush1.msra.mxu0 %v982
    %984 = vmatprep.subr.mxu0 0.0
    %v985 = vand.u32 %v68, 4294901760
    %986 = vmatpush1.msra.mxu0 %v985
    %987 = vmatprep.subr.mxu0 0.0
    %v988 = vand.u32 %v67, 4294901760
    %989 = vmatpush1.msra.mxu0 %v988
    %990 = vmatprep.subr.mxu0 0.0
    %v991 = vand.u32 %v66, 4294901760
    %992 = vmatpush1.msra.mxu0 %v991
    %993 = vmatprep.subr.mxu0 0.0
    %v994 = vand.u32 %v65, 4294901760
    %995 = vmatpush1.msra.mxu0 %v994
    %996 = vmatprep.subr.mxu0 0.0
    %v997 = vand.u32 %v64, 4294901760
    %998 = vmatpush1.msra.mxu0 %v997
    %999 = vmatprep.subr.mxu0 0.0
    %v1000 = vand.u32 %v63, 4294901760
    %1001 = vmatpush1.msra.mxu0 %v1000
    %1002 = vmatprep.subr.mxu0 0.0
    %v1003 = vand.u32 %v62, 4294901760
    %1004 = vmatpush1.msra.mxu0 %v1003
    %1005 = vmatprep.subr.mxu0 0.0
    %v1006 = vand.u32 %v61, 4294901760
    %1007 = vmatpush1.msra.mxu0 %v1006
    %1008 = vmatprep.subr.mxu0 0.0
    %v1009 = vand.u32 %v60, 4294901760
    %1010 = vmatpush1.msra.mxu0 %v1009
    %1011 = vmatprep.subr.mxu0 0.0
    %1012 = vmatpush2.msra.mxu0 0.0
    %1013 = vmatprep.subr.mxu0 0.0
    %1014 = vmatpush2.msra.mxu0 0.0
    %1015 = vmatprep.subr.mxu0 0.0
    %1016 = vmatpush2.msra.mxu0 0.0
    %1017 = vmatprep.subr.mxu0 0.0
    %1018 = vmatpush2.msra.mxu0 0.0
    %1019 = vmatprep.subr.mxu0 0.0
    %1020 = vmatpush2.msra.mxu0 0.0
    %1021 = vmatprep.subr.mxu0 0.0
    %1022 = vmatpush2.msra.mxu0 0.0
    %1023 = vmatprep.subr.mxu0 0.0
    %1024 = vmatpush2.msra.mxu0 0.0
    %1025 = vmatprep.subr.mxu0 0.0
    %1026 = vmatpush2.msra.mxu0 0.0
    %1027 = vmatprep.subr.mxu0 0.0
    %1028 = vmatpush2.msra.mxu0 0.0
    %1029 = vmatprep.subr.mxu0 0.0
    %1030 = vmatpush2.msra.mxu0 0.0
    %1031 = vmatprep.subr.mxu0 0.0
    %1032 = vmatpush2.msra.mxu0 0.0
    %1033 = vmatprep.subr.mxu0 0.0
    %1034 = vmatpush2.msra.mxu0 0.0
    %1035 = vmatprep.subr.mxu0 0.0
    %1036 = vmatpush2.msra.mxu0 0.0
    %1037 = vmatprep.subr.mxu0 0.0
    %1038 = vmatpush2.msra.mxu0 0.0
    %1039 = vmatprep.subr.mxu0 0.0
    %1040 = vmatpush2.msra.mxu0 0.0
    %1041 = vmatprep.subr.mxu0 0.0
    %1042 = vmatpush2.msra.mxu0 0.0
    %1043 = vmatprep.mubr.f32.mxu0 0.0
    %v1044 = vand.u32 %v50, 4294901760
    %1045 = vmatmul.mubr.f32.gmra.mxu0 %v1044
    %v1046 = vpop.f32.mrf.mxu0
    %v1047 = vadd.f32 %v906, %v1046
    %v1048 = vpop.f32.mrf.mxu0
    %1049 = vmatprep.mubr.f32.mxu0 0.0
    %v1050 = vand.u32 %v51, 4294901760
    %1051 = vmatmul.mubr.f32.gmra.mxu0 %v1050
    %v1052 = vpop.f32.mrf.mxu0
    %v1053 = vadd.f32 %v912, %v1052
    %v1054 = vpop.f32.mrf.mxu0
    %1055 = vmatprep.mubr.f32.mxu0 0.0
    %v1056 = vand.u32 %v52, 4294901760
    %1057 = vmatmul.mubr.f32.gmra.mxu0 %v1056
    %v1058 = vpop.f32.mrf.mxu0
    %v1059 = vadd.f32 %v918, %v1058
    %v1060 = vpop.f32.mrf.mxu0
    %1061 = vmatprep.mubr.f32.mxu0 0.0
    %v1062 = vand.u32 %v53, 4294901760
    %1063 = vmatmul.mubr.f32.gmra.mxu0 %v1062
    %v1064 = vpop.f32.mrf.mxu0
    %v1065 = vadd.f32 %v924, %v1064
    %v1066 = vpop.f32.mrf.mxu0
    %1067 = vmatprep.mubr.f32.mxu0 0.0
    %v1068 = vand.u32 %v54, 4294901760
    %1069 = vmatmul.mubr.f32.gmra.mxu0 %v1068
    %v1070 = vpop.f32.mrf.mxu0
    %v1071 = vadd.f32 %v930, %v1070
    %v1072 = vpop.f32.mrf.mxu0
    %1073 = vmatprep.mubr.f32.mxu0 0.0
    %v1074 = vand.u32 %v55, 4294901760
    %1075 = vmatmul.mubr.f32.gmra.mxu0 %v1074
    %v1076 = vpop.f32.mrf.mxu0
    %v1077 = vadd.f32 %v936, %v1076
    %v1078 = vpop.f32.mrf.mxu0
    %1079 = vmatprep.mubr.f32.mxu0 0.0
    %v1080 = vand.u32 %v56, 4294901760
    %1081 = vmatmul.mubr.f32.gmra.mxu0 %v1080
    %v1082 = vpop.f32.mrf.mxu0
    %v1083 = vadd.f32 %v942, %v1082
    %v1084 = vpop.f32.mrf.mxu0
    %1085 = vmatprep.mubr.f32.mxu0 0.0
    %v1086 = vand.u32 %v57, 4294901760
    %1087 = vmatmul.mubr.f32.gmra.mxu0 %v1086
    %v1088 = vpop.f32.mrf.mxu0
    %v1089 = vadd.f32 %v948, %v1088
    %v1090 = vpop.f32.mrf.mxu0
    %1091 = vmatprep.mubr.f32.mxu0 0.0
    %v1092 = vand.u32 %v58, 4294901760
    %1093 = vmatmul.mubr.f32.gmra.mxu0 %v1092
    %v1094 = vpop.f32.mrf.mxu0
    %v1095 = vadd.f32 %v954, %v1094
    %v1096 = vpop.f32.mrf.mxu0
    %1097 = vmatprep.mubr.f32.mxu0 0.0
    %v1098 = vand.u32 %v59, 4294901760
    %1099 = vmatmul.mubr.f32.gmra.mxu0 %v1098
    %v1100 = vpop.f32.mrf.mxu0
    %v1101 = vadd.f32 %v960, %v1100
    %v1102 = vpop.f32.mrf.mxu0
    %1103 = vdwg.mxu0
    %v1104 = vrsqrt.pop %v1047
    %v1105 = vrsqrt.pop %v1053
    %v1106 = vrsqrt.pop %v1059
    %v1107 = vrsqrt.pop %v1065
    %v1108 = vrsqrt.pop %v1071
    %v1109 = vrsqrt.pop %v1077
    %v1110 = vrsqrt.pop %v1083
    %v1111 = vrsqrt.pop %v1089
    %v1112 = vrsqrt.pop %v1095
    %v1113 = vrsqrt.pop %v1101
    %v1114 = vmul.f32 %v40, %v1104
    %v1115 = vmul.f32 %v41, %v1105
    %v1116 = vmul.f32 %v42, %v1106
    %v1117 = vmul.f32 %v43, %v1107
    %v1118 = vmul.f32 %v44, %v1108
    %v1119 = vmul.f32 %v45, %v1109
    %v1120 = vmul.f32 %v46, %v1110
    %v1121 = vmul.f32 %v47, %v1111
    %v1122 = vmul.f32 %v48, %v1112
    %v1123 = vmul.f32 %v49, %v1113
    %1124 = vst [vmem:[#allocation7] sm:$0xff] %v1114
    %1125 = vst [vmem:[#allocation7 + $0x8] sm:$0xff] %v1115
    %1126 = vst [vmem:[#allocation7 + $0x10] sm:$0xff] %v1116
    %1127 = vst [vmem:[#allocation7 + $0x18] sm:$0xff] %v1117
    %1128 = vst [vmem:[#allocation7 + $0x20] sm:$0xff] %v1118
    %1129 = vst [vmem:[#allocation7 + $0x28] sm:$0xff] %v1119
    %1130 = vst [vmem:[#allocation7 + $0x30] sm:$0xff] %v1120
    %1131 = vst [vmem:[#allocation7 + $0x38] sm:$0xff] %v1121
    %1132 = vst [vmem:[#allocation7 + $0x40] sm:$0xff] %v1122
    %1133 = vst [vmem:[#allocation7 + $0x48] sm:$0xff] %v1123
    // Predicated region
    $region18: #{tpu_custom_call.1} parent=1 // pred_check
      _
    $region19: #{tpu_custom_call.1} parent=1 // pred_check_branch
      %1135 = sbr.rel (0) target = $region21
    $region20: #{tpu_custom_call.1} parent=1 // pred_region
      %s1137 = ssub.s32 1280, 1280
      %1138 = vsyncadd [#allocation4], %s1137
      %s1139 = sshll.u32 [#allocation7], 4
      %s1140 = int_to_ptr.vmem [resolvable:$true] %s1139
      %1145 = dma.vmem_to_hbm [thread:$0]  %s1140, 1280, %s2, [#allocation4], 128, 128, 8
    $region21: #{tpu_custom_call.1} parent=1 // pred_fallthru
      _
    // Predicated region
    $region22: #{tpu_custom_call.1} parent=1 // pred_check
      _
    $region23: #{tpu_custom_call.1} parent=1 // pred_check_branch
      %1147 = sbr.rel (0) target = $region25
    $region24: #{tpu_custom_call.1} parent=1 // pred_region
      %1148 = dma.done [#allocation4], 1280
    $region25: #{tpu_custom_call.1} parent=1 // pred_fallthru
      _
    %1149 = vsyncpa [#allocation3], 1
    %1150 = vsyncpa [#allocation6], 1
    %1151 = vsyncpa [#allocation4], 1

</llo_original>
